<compile_context>
chip_gen: v7x
topology: tpu7x:2x2x1
jax: 0.10.0
libtpu: 0.0.40
codegen_flags: <defaults>
</compile_context>

<pallas_src>
import functools

import jax
import jax.numpy as jnp
from jax.experimental import pallas as pl
from jax.experimental.pallas import tpu as pltpu


def _distill_kl_kernel(ys_ref, yt_ref, out_ref, *, inv_temp, batch, block_rows,
                       ragged):
    # Upcast + scale by 1/T with a multiply (no per-element divide).
    ys = ys_ref[...].astype(jnp.float32) * inv_temp
    yt = yt_ref[...].astype(jnp.float32) * inv_temp

    # Student: numerically-stable log-partition only (log_p_s never built).
    ys_max = jnp.max(ys, axis=1, keepdims=True)
    ys_shift = ys - ys_max
    log_z_s = jnp.log(jnp.sum(jnp.exp(ys_shift), axis=1, keepdims=True))

    # Teacher: stable softmax pieces (p_t / log_p_t never built element-wise).
    yt_max = jnp.max(yt, axis=1, keepdims=True)
    yt_shift = yt - yt_max
    exp_t = jnp.exp(yt_shift)
    z_t = jnp.sum(exp_t, axis=1, keepdims=True)

    #   sum_c p_t * (log p_t - log p_s)
    # = (1/z_t) * sum_c exp_t * (yt_shift - ys_shift) + (log z_s - log z_t)
    # The per-row log-partition terms factor out because sum_c p_t = 1, so the
    # only divide / extra log are per ROW, not per element.
    inner = jnp.sum(exp_t * (yt_shift - ys_shift), axis=1, keepdims=True)
    kl_row = inner / z_t + (log_z_s - jnp.log(z_t))

    if ragged:
        # Row-level mask only (cheap (TB,1) select). Padded-DMA garbage rows may
        # produce Inf/NaN in kl_row, but jnp.where (select) does not propagate
        # values from the unselected branch, so they are squashed exactly to 0.
        blk = pl.program_id(0)
        row_ids = (jax.lax.broadcasted_iota(jnp.int32, kl_row.shape, 0)
                   + blk * block_rows)
        kl_row = jnp.where(row_ids < batch, kl_row, 0.0)

    partial = jnp.sum(kl_row)
    # Lane-dense per-block partial (one (1, 8, 128) tile -> unmasked vst).
    out_ref[...] = jnp.full(out_ref.shape, partial, dtype=jnp.float32)


def _round_up(x, m):
    return ((x + m - 1) // m) * m


def _vmem_capacity_bytes():
    """Per-core VMEM capacity; conservative fallback if the query fails."""
    try:
        return int(pltpu.get_tpu_info().vmem_capacity_bytes)
    except Exception:
        return 64 * 1024 * 1024          # assume the smallest (v7x-like) VMEM


def _tile_policy(B, C, itemsize, block_rows=None):
    """Pick the batch tile TB and an explicit VMEM limit.

    VMEM model per row of tile: 2 inputs x 2 pipeline buffers (input dtype)
    plus ~5 live (TB, C) f32 working arrays inside the kernel.
    """
    # Row alignment keyed to sublane packing of the input dtype:
    #   f32 -> 8, bf16 -> 16, int8/fp8 -> 32.
    align = max(8, 32 // max(1, itemsize))
    padded_b = _round_up(B, align)

    cap = _vmem_capacity_bytes()          # 128 MiB v5e/v6e, 64 MiB v7x
    budget = (cap * 3) // 4               # leave 25% headroom

    per_row_bytes = C * (4 * itemsize + 5 * 4)

    if block_rows is None:
        tb = (budget // max(1, per_row_bytes)) // align * align
        tb = max(align, tb)
        # Keep >= ~4 blocks when the batch allows it so the "parallel" batch
        # axis has work to shard across TensorCores (v7x megacore) and the
        # pipeline has something to overlap.
        if padded_b >= 4 * align:
            cap_rows = max(align, (padded_b // 4) // align * align)
            tb = min(tb, cap_rows)
        tb = min(tb, padded_b)
    else:
        tb = block_rows

    # Explicit scoped-VMEM limit sized from the actual footprint + headroom
    # (avoids colliding with v5e's 16 MiB default; never exceeds physical).
    footprint = tb * per_row_bytes + (8 << 20)
    vmem_limit = int(min(cap, max(footprint, 32 << 20)))
    return tb, vmem_limit


def distill_kl(y_s, y_t, T, block_rows=None):
    """Pallas TPU implementation of DistillKL.forward. Returns a scalar f32."""
    assert y_s.shape == y_t.shape and y_s.ndim == 2
    B, C = y_s.shape
    itemsize = jnp.dtype(y_s.dtype).itemsize

    TB, vmem_limit = _tile_policy(B, C, itemsize, block_rows)
    assert TB % 8 == 0
    num_blocks = pl.cdiv(B, TB)
    ragged = (B % TB) != 0

    cost = pl.CostEstimate(
        flops=10 * B * C,
        transcendentals=2 * B * C,                       # two exp() per element
        bytes_accessed=2 * B * C * itemsize + num_blocks * 8 * 128 * 4,
    )

    kernel = functools.partial(
        _distill_kl_kernel,
        inv_temp=1.0 / float(T),
        batch=B,
        block_rows=TB,
        ragged=ragged,
    )

    partials = pl.pallas_call(
        kernel,
        out_shape=jax.ShapeDtypeStruct((num_blocks, 8, 128), jnp.float32),
        grid=(num_blocks,),
        in_specs=[
            pl.BlockSpec((TB, C), lambda i: (i, 0)),
            pl.BlockSpec((TB, C), lambda i: (i, 0)),
        ],
        out_specs=pl.BlockSpec((1, 8, 128), lambda i: (i, 0, 0)),
        compiler_params=pltpu.CompilerParams(
            dimension_semantics=("parallel",),   # shard batch tiles across TCs
            vmem_limit_bytes=vmem_limit,
        ),
        cost_estimate=cost,
    )(y_s, y_t)

    # Final reduction + scaling in the wrapper (applied exactly once).
    return partials[:, 0, 0].sum() * (float(T) ** 2) / B


def distill_kl_ref(y_s, y_t, T):
    """Pure-JAX reference for sanity checking (computed in f32)."""
    y_s = y_s.astype(jnp.float32)
    y_t = y_t.astype(jnp.float32)
    log_p_s = jax.nn.log_softmax(y_s / T, axis=1)
    p_t = jax.nn.softmax(y_t / T, axis=1)
    kl = jnp.sum(p_t * (jnp.log(p_t) - log_p_s))
    return kl * (T ** 2) / y_s.shape[0]


if __name__ == "__main__":
    T = 4.0
    key = jax.random.PRNGKey(0)
    k1, k2, k3, k4, k5, k6, k7, k8 = jax.random.split(key, 8)

    # Case 1: small aligned batch (single grid block, auto tile policy).
    B, C = 8, 32
    y_s = jax.random.normal(k1, (B, C), dtype=jnp.float32)
    y_t = jax.random.normal(k2, (B, C), dtype=jnp.float32)
    loss = jax.block_until_ready(distill_kl(y_s, y_t, T))
    ref = distill_kl_ref(y_s, y_t, T)
    assert jnp.allclose(loss, ref, rtol=1e-5, atol=1e-5), (loss, ref)

    # Case 2: ragged batch across multiple grid blocks (exercises the
    # row-mask path and the per-block partial-sum path).
    B2, C2 = 20, 32
    y_s2 = jax.random.normal(k3, (B2, C2), dtype=jnp.float32)
    y_t2 = jax.random.normal(k4, (B2, C2), dtype=jnp.float32)
    loss2 = jax.block_until_ready(distill_kl(y_s2, y_t2, T, block_rows=8))
    ref2 = distill_kl_ref(y_s2, y_t2, T)
    assert jnp.allclose(loss2, ref2, rtol=1e-5, atol=1e-5), (loss2, ref2)

    # Case 3: larger aligned batch hits the ">= 4 blocks" cap of the auto
    # tile policy (multi-block parallel path, no raggedness).
    B3, C3 = 64, 128
    y_s3 = jax.random.normal(k5, (B3, C3), dtype=jnp.float32)
    y_t3 = jax.random.normal(k6, (B3, C3), dtype=jnp.float32)
    loss3 = jax.block_until_ready(distill_kl(y_s3, y_t3, T))
    ref3 = distill_kl_ref(y_s3, y_t3, T)
    assert jnp.allclose(loss3, ref3, rtol=1e-5, atol=1e-5), (loss3, ref3)

    # Case 4: bf16 logits end-to-end (no wrapper upcast; kernel computes f32).
    B4, C4 = 32, 40
    y_s4 = jax.random.normal(k7, (B4, C4), dtype=jnp.bfloat16)
    y_t4 = jax.random.normal(k8, (B4, C4), dtype=jnp.bfloat16)
    loss4 = jax.block_until_ready(distill_kl(y_s4, y_t4, T))
    ref4 = distill_kl_ref(y_s4, y_t4, T)
    assert jnp.allclose(loss4, ref4, rtol=1e-4, atol=1e-4), (loss4, ref4)

    print("KERNEL_OK")
</pallas_src>

<mosaic_0001>
module attributes {stable_mosaic.version = 11 : i64} {
  func.func @_distill_kl_kernel(%arg0: i32, %arg1: memref<8x32xf32, #tpu.memory_space<vmem>>, %arg2: memref<8x32xf32, #tpu.memory_space<vmem>>, %arg3: memref<1x8x128xf32, #tpu.memory_space<vmem>>) attributes {dimension_semantics = [#tpu.dimension_semantics<parallel>], iteration_bounds = array<i64: 1>, scalar_prefetch = 0 : i64, scratch_operands = 0 : i64, tpu.core_type = #tpu.core_type<tc>, window_params = [{transform_indices = @transform_0, window_bounds = array<i64: 8, 32>}, {transform_indices = @transform_1, window_bounds = array<i64: 8, 32>}, {transform_indices = @transform_2, window_bounds = array<i64: 1, 8, 128>}]} {
    %c0 = arith.constant 0 : index
    %c0_0 = arith.constant 0 : index
    %0 = vector.load %arg1[%c0, %c0_0] : memref<8x32xf32, #tpu.memory_space<vmem>>, vector<8x32xf32>
    %cst = arith.constant 2.500000e-01 : f32
    %1 = vector.broadcast %cst : f32 to vector<8x32xf32>
    %2 = arith.mulf %0, %1 : vector<8x32xf32>
    %c0_1 = arith.constant 0 : index
    %c0_2 = arith.constant 0 : index
    %3 = vector.load %arg2[%c0_1, %c0_2] : memref<8x32xf32, #tpu.memory_space<vmem>>, vector<8x32xf32>
    %cst_3 = arith.constant 2.500000e-01 : f32
    %4 = vector.broadcast %cst_3 : f32 to vector<8x32xf32>
    %5 = arith.mulf %3, %4 : vector<8x32xf32>
    %cst_4 = arith.constant dense<0xFF800000> : vector<8xf32>
    %6 = vector.multi_reduction <maximumf>, %2, %cst_4 [1] : vector<8x32xf32> to vector<8xf32>
    %7 = vector.shape_cast %6 : vector<8xf32> to vector<8x1xf32>
    %8 = vector.broadcast %7 : vector<8x1xf32> to vector<8x32xf32>
    %9 = arith.subf %2, %8 : vector<8x32xf32>
    %10 = math.exp %9 : vector<8x32xf32>
    %cst_5 = arith.constant dense<0.000000e+00> : vector<8xf32>
    %11 = vector.multi_reduction <add>, %10, %cst_5 [1] : vector<8x32xf32> to vector<8xf32>
    %12 = vector.shape_cast %11 : vector<8xf32> to vector<8x1xf32>
    %13 = math.log %12 : vector<8x1xf32>
    %cst_6 = arith.constant dense<0xFF800000> : vector<8xf32>
    %14 = vector.multi_reduction <maximumf>, %5, %cst_6 [1] : vector<8x32xf32> to vector<8xf32>
    %15 = vector.shape_cast %14 : vector<8xf32> to vector<8x1xf32>
    %16 = vector.broadcast %15 : vector<8x1xf32> to vector<8x32xf32>
    %17 = arith.subf %5, %16 : vector<8x32xf32>
    %18 = math.exp %17 : vector<8x32xf32>
    %cst_7 = arith.constant dense<0.000000e+00> : vector<8xf32>
    %19 = vector.multi_reduction <add>, %18, %cst_7 [1] : vector<8x32xf32> to vector<8xf32>
    %20 = vector.shape_cast %19 : vector<8xf32> to vector<8x1xf32>
    %21 = arith.subf %17, %9 : vector<8x32xf32>
    %22 = arith.mulf %18, %21 : vector<8x32xf32>
    %cst_8 = arith.constant dense<0.000000e+00> : vector<8xf32>
    %23 = vector.multi_reduction <add>, %22, %cst_8 [1] : vector<8x32xf32> to vector<8xf32>
    %24 = vector.shape_cast %23 : vector<8xf32> to vector<8x1xf32>
    %25 = arith.divf %24, %20 : vector<8x1xf32>
    %26 = math.log %20 : vector<8x1xf32>
    %27 = arith.subf %13, %26 : vector<8x1xf32>
    %28 = arith.addf %25, %27 : vector<8x1xf32>
    %29 = vector.shape_cast %28 : vector<8x1xf32> to vector<1x8x1xf32>
    %cst_9 = arith.constant dense<0.000000e+00> : vector<1xf32>
    %30 = vector.multi_reduction <add>, %29, %cst_9 [1, 2] : vector<1x8x1xf32> to vector<1xf32>
    %31 = vector.shape_cast %30 : vector<1xf32> to vector<1x1x1xf32>
    %32 = vector.extract %31[0, 0, 0] : f32 from vector<1x1x1xf32>
    %33 = vector.broadcast %32 : f32 to vector<1x8x128xf32>
    %c0_10 = arith.constant 0 : index
    %c0_11 = arith.constant 0 : index
    %c0_12 = arith.constant 0 : index
    %34 = vector.load %arg3[%c0_10, %c0_11, %c0_12] : memref<1x8x128xf32, #tpu.memory_space<vmem>>, vector<1x8x128xf32>
    tpu.vector_store %arg3[%c0_10, %c0_11, %c0_12], %33 {strides = array<i32>} : memref<1x8x128xf32, #tpu.memory_space<vmem>>, vector<1x8x128xf32>,
    return
  }
  func.func @transform_0(%arg0: i32) -> (i32, i32) {
    %c0_i32 = arith.constant 0 : i32
    %c0_i32_0 = arith.constant 0 : i32
    return %arg0, %c0_i32 : i32, i32
  }
  func.func @transform_1(%arg0: i32) -> (i32, i32) {
    %c0_i32 = arith.constant 0 : i32
    %c0_i32_0 = arith.constant 0 : i32
    return %arg0, %c0_i32 : i32, i32
  }
  func.func @transform_2(%arg0: i32) -> (i32, i32, i32) {
    %c0_i32 = arith.constant 0 : i32
    %c0_i32_0 = arith.constant 0 : i32
    %c0_i32_1 = arith.constant 0 : i32
    return %arg0, %c0_i32, %c0_i32_0 : i32, i32, i32
  }
}

</mosaic_0001>

<llo_original>
// kernel: tpu_custom_call.1
$region0: #{tpu_custom_call.1}
  #allocation0 [shape = 'u32[]', space=smem, size = 0x4, offset = 0x4, fixed_abs, tag = 'smem constant byte address 0x4 - core index']
  #allocation1 [shape = 'u32[144,128]{1,0:T(1,128)}', space=vmem, size = 0x12000, scoped, tag = 'internal scratch']
  %s0 = inlined_call_operand.hbm [shape: f32[8,32], index: 0, kind: input, shape index: {}]
  %s1 = inlined_call_operand.hbm [shape: f32[8,32], index: 1, kind: input, shape index: {}]
  %s2 = inlined_call_operand.hbm [shape: f32[1,8,128], index: 2, kind: output, shape index: {}]
  %s3 = sld [smem:[#allocation0]]
  $region26: #{tpu_custom_call.1} parent=0
    _
  %s5 = ssub.s32 1, %s3
  %s6 = scalar_select 0, %s5, %s3
  $region1: #{tpu_custom_call.1} parent=0
    #allocation2 [shape = 'u8[4096]{0}', space=vmem, size = 0x1000, scoped, tag = 'input window, operand 0, single buffered']
    #allocation3 [shape = 's32[1]{0}', space=sflag, size = 0x4, scoped, tag = 'scoped memory for tpu_custom_call.1']
    #allocation4 [shape = 's32[1]{0}', space=sflag, size = 0x4, scoped, tag = 'scoped memory for tpu_custom_call.1']
    #allocation5 [shape = 'u8[4096]{0}', space=vmem, size = 0x1000, scoped, tag = 'input window, operand 1, single buffered']
    #allocation6 [shape = 's32[1]{0}', space=sflag, size = 0x4, scoped, tag = 'scoped memory for tpu_custom_call.1']
    #allocation7 [shape = 'u8[4096]{0}', space=vmem, size = 0x1000, scoped, tag = 'output window, operand 0, single buffered']
    %7 = vsyncpa [#allocation3], 0
    %8 = vsyncpa [#allocation6], 0
    %9 = vsyncpa [#allocation4], 0
    // Predicated region
    $region2: #{tpu_custom_call.1} parent=1 // pred_check
      _
    $region3: #{tpu_custom_call.1} parent=1 // pred_check_branch
      %11 = sbr.rel (0) target = $region5
    $region4: #{tpu_custom_call.1} parent=1 // pred_region
      %s13 = ssub.s32 128, 128
      %14 = vsyncadd [#allocation3], %s13
      %s16 = sshll.u32 [#allocation2], 4
      %s17 = int_to_ptr.vmem [resolvable:$true] %s16
      %19 = dma.hbm_to_vmem [thread:$0]  %s0, 128, %s17, [#allocation3]
    $region5: #{tpu_custom_call.1} parent=1 // pred_fallthru
      _
    // Predicated region
    $region6: #{tpu_custom_call.1} parent=1 // pred_check
      _
    $region7: #{tpu_custom_call.1} parent=1 // pred_check_branch
      %21 = sbr.rel (0) target = $region9
    $region8: #{tpu_custom_call.1} parent=1 // pred_region
      %s23 = ssub.s32 128, 128
      %24 = vsyncadd [#allocation6], %s23
      %s26 = sshll.u32 [#allocation5], 4
      %s27 = int_to_ptr.vmem [resolvable:$true] %s26
      %29 = dma.hbm_to_vmem [thread:$0]  %s1, 128, %s27, [#allocation6]
    $region9: #{tpu_custom_call.1} parent=1 // pred_fallthru
      _
    // Predicated region
    $region10: #{tpu_custom_call.1} parent=1 // pred_check
      _
    $region11: #{tpu_custom_call.1} parent=1 // pred_check_branch
      %31 = sbr.rel (0) target = $region13
    $region12: #{tpu_custom_call.1} parent=1 // pred_region
      %32 = dma.done [#allocation3], 128
    $region13: #{tpu_custom_call.1} parent=1 // pred_fallthru
      _
    // Predicated region
    $region14: #{tpu_custom_call.1} parent=1 // pred_check
      _
    $region15: #{tpu_custom_call.1} parent=1 // pred_check_branch
      %34 = sbr.rel (0) target = $region17
    $region16: #{tpu_custom_call.1} parent=1 // pred_region
      %35 = dma.done [#allocation6], 128
    $region17: #{tpu_custom_call.1} parent=1 // pred_fallthru
      _
    %v36 = vld [vmem:[#allocation2] sm:$0xff]
    %v37 = vmul.f32 %v36, 0.25
    %v38 = vld [vmem:[#allocation5] sm:$0xff]
    %v39 = vmul.f32 %v38, 0.25
    %vm40 = vcmask 261120
    %v41 = vsel %vm40, %v37, -inf
    %42 = vmax.xlane.f32.xlu0 %v41
    %v43 = vpop.xlane.xlu0 %42
    %v44 = vsub.f32 %v37, %v43
    %v45 = vmul.f32 %v44, 1.442695
    %v46 = vpow.pop %v45
    %v47 = vsel %vm40, %v46, 0.0
    %48 = vadd.xlane.f32.xlu0 %v47
    %v49 = vpop.xlane.xlu0 %48
    %v50 = vlog2.pop %v49
    %v51 = vmul.f32 %v50, 0.6931472
    %v52 = vsel %vm40, %v39, -inf
    %53 = vmax.xlane.f32.xlu0 %v52
    %v54 = vpop.xlane.xlu0 %53
    %v55 = vsub.f32 %v39, %v54
    %v56 = vmul.f32 %v55, 1.442695
    %v57 = vpow.pop %v56
    %v58 = vsel %vm40, %v57, 0.0
    %59 = vadd.xlane.f32.xlu0 %v58
    %v60 = vpop.xlane.xlu0 %59
    %v61 = vsub.f32 %v55, %v44
    %v62 = vmul.f32 %v57, %v61
    %v63 = vsel %vm40, %v62, 0.0
    %64 = vadd.xlane.f32.xlu0 %v63
    %v65 = vpop.xlane.xlu0 %64
    %v66 = vrcp.pop %v60
    %v67 = vmul.f32 %v65, %v66
    %v68 = vlog2.pop %v60
    %v69 = vmul.f32 %v68, 0.6931472
    %v70 = vsub.f32 %v51, %v69
    %v71 = vadd.f32 %v67, %v70
    %vm72 = vcmask 7168
    %v73 = vsel %vm72, %v71, 0.0
    %74 = vadd.xlane.f32.xlu0 %v73
    %v75 = vpop.xlane.xlu0 %74
    %v76 = vrot.slane %v75, 4
    %v77 = vadd.f32 %v75, %v76
    %v78 = vrot.slane %v77, 2
    %v79 = vadd.f32 %v77, %v78
    %v80 = vrot.slane %v79, 1
    %v81 = vadd.f32 %v79, %v80
    %s82 = vtos %v81
    %v83 = vstv %s82
    %84 = vst [vmem:[#allocation7] sm:$0xff] %v83
    // Predicated region
    $region18: #{tpu_custom_call.1} parent=1 // pred_check
      _
    $region19: #{tpu_custom_call.1} parent=1 // pred_check_branch
      %86 = sbr.rel (0) target = $region21
    $region20: #{tpu_custom_call.1} parent=1 // pred_region
      %s88 = ssub.s32 128, 128
      %89 = vsyncadd [#allocation4], %s88
      %s91 = sshll.u32 [#allocation7], 4
      %s92 = int_to_ptr.vmem [resolvable:$true] %s91
      %94 = dma.vmem_to_hbm [thread:$0]  %s92, 128, %s2, [#allocation4]
    $region21: #{tpu_custom_call.1} parent=1 // pred_fallthru
      _
    // Predicated region
    $region22: #{tpu_custom_call.1} parent=1 // pred_check
      _
    $region23: #{tpu_custom_call.1} parent=1 // pred_check_branch
      %96 = sbr.rel (0) target = $region25
    $region24: #{tpu_custom_call.1} parent=1 // pred_region
      %97 = dma.done [#allocation4], 128
    $region25: #{tpu_custom_call.1} parent=1 // pred_fallthru
      _
    %98 = vsyncpa [#allocation3], 1
    %99 = vsyncpa [#allocation6], 1
    %100 = vsyncpa [#allocation4], 1

</llo_original>
